<compile_context>
chip_gen: v6e
topology: v6e:2x2x1
jax: 0.10.0
libtpu: 0.0.40
codegen_flags: <defaults>
</compile_context>

<pallas_src>
import functools

import jax
import jax.numpy as jnp
from jax.experimental import pallas as pl
from jax.experimental.pallas import tpu as pltpu


def _a2c_kernel(x_ref, p1_ref, p2_ref, out_ref):
    # x_ref  : (TB, S)        input tile (f32)
    # p1_ref : (S + 1, H)     rows [w1 ; b1]            (f32, VPU layer)
    # p2_ref : (H + 1, OUTW)  rows [[wa | wc | 0] ; [ba | bc | 0]]  (f32 or bf16)
    # out_ref: (TB, OUTW)     narrow fused output slab  (f32)
    S = x_ref.shape[1]
    H = p1_ref.shape[1]

    x = x_ref[...]                                    # (TB, S)

    # ---- layer 1 on the VPU: K=S is tiny, an MXU dot would waste ~97% of the
    # systolic array and add push/pop latency.  Unrolled broadcast-FMAs.
    h = p1_ref[S:S + 1, :]                            # (1, H) bias row
    for s in range(S):                                # static unroll, S small
        h = h + x[:, s:s + 1] * p1_ref[s:s + 1, :]    # (TB,1)*(1,H) -> (TB,H)
    h = jnp.maximum(h, 0.0)                           # ReLU (f32 VPU)

    # ---- fused actor+critic heads: the one well-shaped MXU matmul.
    w2 = p2_ref[:H, :]                                # (H, OUTW)
    b2 = p2_ref[H:H + 1, :].astype(jnp.float32)       # (1, OUTW)
    out = jnp.dot(h.astype(w2.dtype), w2,
                  preferred_element_type=jnp.float32) + b2
    out_ref[...] = out.astype(out_ref.dtype)


def pack_params(params, head_dtype=jnp.float32):
    """One-time packing of A2CNet parameters into two kernel arrays.

    params: w1 (S,H), b1 (1,H), wa (H,A), ba (1,A), wc (H,1), bc (1,1)
    returns dict with:
      p1: (S+1, H)     = [w1 ; b1]                       (always f32 — VPU layer)
      p2: (H+1, OUTW)  = [[wa | wc | 0] ; [ba | bc | 0]] (f32 or bf16),
          OUTW = A+1 rounded up to 8 lanes (narrow output slab).
    """
    w1, b1 = params["w1"], params["b1"]
    wa, ba = params["wa"], params["ba"]
    wc, bc = params["wc"], params["bc"]
    S, H = w1.shape
    A = wa.shape[1]
    OUTW = max(8, ((A + 1 + 7) // 8) * 8)

    p1 = jnp.concatenate([w1, b1.reshape(1, H)], axis=0).astype(jnp.float32)

    w_heads = jnp.zeros((H, OUTW), jnp.float32)
    w_heads = w_heads.at[:, :A].set(wa)
    w_heads = w_heads.at[:, A:A + 1].set(wc)
    b_heads = jnp.zeros((1, OUTW), jnp.float32)
    b_heads = b_heads.at[:, :A].set(ba.reshape(1, A))
    b_heads = b_heads.at[:, A:A + 1].set(bc.reshape(1, 1))
    p2 = jnp.concatenate([w_heads, b_heads], axis=0).astype(head_dtype)

    return {"p1": p1, "p2": p2, "state_dim": S, "hidden": H,
            "action_dim": A, "out_width": OUTW}


def _choose_tile(B, cap):
    """Batch tile: multiple of 8, <= cap, and >= 2 grid steps when B > 8."""
    cap = max(8, (cap // 8) * 8)
    if B <= 8:
        return B                               # single block == full array dim
    half = -(-B // 2)                          # ceil(B/2)
    half = -(-half // 8) * 8                   # round up to sublane multiple
    return min(cap, half)


def a2c_forward(x, packed, *, tile_rows_cap=2048, min_pallas_rows=16):
    """Pallas forward of A2CNet.

    x: (B, state_dim) float32
    packed: output of pack_params()
    returns: (logits (B, A), value (B, 1))
    """
    B, S = x.shape
    assert S == packed["state_dim"]
    p1, p2 = packed["p1"], packed["p2"]
    H = packed["hidden"]
    A = packed["action_dim"]
    OUTW = packed["out_width"]
    x = x.astype(jnp.float32)

    if B < min_pallas_rows:
        # Tiny (single-env-step) batches: pallas_call fixed overhead exceeds
        # the whole 2-layer MLP; let XLA fuse it.
        h = jnp.maximum(jnp.dot(x, p1[:S]) + p1[S:S + 1], 0.0)
        out = jnp.dot(h.astype(p2.dtype), p2[:H],
                      preferred_element_type=jnp.float32) + p2[H:H + 1].astype(jnp.float32)
        return out[:, :A], out[:, A:A + 1]

    TB = _choose_tile(B, tile_rows_cap)
    grid = (pl.cdiv(B, TB),)                   # partial edge block is clipped by Pallas

    out = pl.pallas_call(
        _a2c_kernel,
        out_shape=jax.ShapeDtypeStruct((B, OUTW), jnp.float32),
        grid_spec=pltpu.PrefetchScalarGridSpec(
            num_scalar_prefetch=0,
            grid=grid,
            in_specs=[
                pl.BlockSpec((TB, S), lambda i: (i, 0)),          # x tile
                pl.BlockSpec((S + 1, H), lambda i: (0, 0)),       # layer-1 pack (resident)
                pl.BlockSpec((H + 1, OUTW), lambda i: (0, 0)),    # heads pack (resident)
            ],
            out_specs=pl.BlockSpec((TB, OUTW), lambda i: (i, 0)),
        ),
        compiler_params=pltpu.CompilerParams(
            dimension_semantics=("parallel",)),                   # megacore / v7x 2-TC
    )(x, p1, p2)

    logits = out[:, :A]
    value = out[:, A:A + 1]
    return logits, value


def init_params(key, state_dim, action_dim, hidden=128):
    """Deterministic init mimicking PyTorch nn.Linear (uniform +-1/sqrt(fan_in))."""
    k1, k2, k3, k4, k5, k6 = jax.random.split(key, 6)

    def lin(kw, kb, fan_in, fan_out):
        bound = 1.0 / jnp.sqrt(fan_in)
        w = jax.random.uniform(kw, (fan_in, fan_out), jnp.float32, -bound, bound)
        b = jax.random.uniform(kb, (1, fan_out), jnp.float32, -bound, bound)
        return w, b

    w1, b1 = lin(k1, k2, state_dim, hidden)
    wa, ba = lin(k3, k4, hidden, action_dim)
    wc, bc = lin(k5, k6, hidden, 1)
    return {"w1": w1, "b1": b1, "wa": wa, "ba": ba, "wc": wc, "bc": bc}


def reference_forward(x, p):
    hp = jax.lax.Precision.HIGHEST
    h = jnp.maximum(jnp.dot(x, p["w1"], precision=hp) + p["b1"], 0.0)
    logits = jnp.dot(h, p["wa"], precision=hp) + p["ba"]
    value = jnp.dot(h, p["wc"], precision=hp) + p["bc"]
    return logits, value


# TODO(synk): act()/evaluate_actions() (Categorical sampling, log_prob, entropy)
# are host/post-processing ops, not part of the forward pass translated here.

if __name__ == "__main__":
    key = jax.random.PRNGKey(0)
    kx, kp = jax.random.split(key)

    batch, state_dim, action_dim = 100, 4, 2   # CartPole-like; rollout-sized batch
    x = jax.random.normal(kx, (batch, state_dim), jnp.float32)
    params = init_params(kp, state_dim, action_dim)

    ref_logits, ref_value = reference_forward(x, params)

    # --- f32 head weights (default): exercises 2-step parallel grid + partial
    # edge block (100 rows, 56-row tiles), layer-1 on VPU, narrow 8-lane output.
    packed = pack_params(params)
    logits, value = a2c_forward(x, packed)
    jax.block_until_ready((logits, value))
    assert logits.shape == (batch, action_dim)
    assert value.shape == (batch, 1)
    assert jnp.allclose(logits, ref_logits, atol=1e-2, rtol=1e-2)
    assert jnp.allclose(value, ref_value, atol=1e-2, rtol=1e-2)

    # --- bf16 head weights (MXU-native rate on v6e/v7x), f32 accumulation.
    packed_bf16 = pack_params(params, head_dtype=jnp.bfloat16)
    logits_b, value_b = a2c_forward(x, packed_bf16)
    jax.block_until_ready((logits_b, value_b))
    assert jnp.allclose(logits_b, ref_logits, atol=5e-2, rtol=5e-2)
    assert jnp.allclose(value_b, ref_value, atol=5e-2, rtol=5e-2)

    # --- tiny single-step batch takes the plain-jnp fast path.
    x_small = x[:4]
    logits_s, value_s = a2c_forward(x_small, packed)
    jax.block_until_ready((logits_s, value_s))
    assert logits_s.shape == (4, action_dim) and value_s.shape == (4, 1)
    assert jnp.allclose(logits_s, ref_logits[:4], atol=1e-2, rtol=1e-2)
    assert jnp.allclose(value_s, ref_value[:4], atol=1e-2, rtol=1e-2)

    print("KERNEL_OK")
</pallas_src>

<mosaic_0001>
module attributes {stable_mosaic.version = 11 : i64} {
  func.func @_a2c_kernel(%arg0: i32, %arg1: memref<56x4xf32, #tpu.memory_space<vmem>>, %arg2: memref<5x128xf32, #tpu.memory_space<vmem>>, %arg3: memref<129x8xf32, #tpu.memory_space<vmem>>, %arg4: memref<56x8xf32, #tpu.memory_space<vmem>>) attributes {dimension_semantics = [#tpu.dimension_semantics<parallel>], iteration_bounds = array<i64: 2>, scalar_prefetch = 0 : i64, scratch_operands = 0 : i64, tpu.core_type = #tpu.core_type<tc>, window_params = [{transform_indices = @transform_0, window_bounds = array<i64: 56, 4>}, {pipeline_mode = #tpu.pipeline_mode<synchronous>, transform_indices = @transform_1, window_bounds = array<i64: 5, 128>}, {pipeline_mode = #tpu.pipeline_mode<synchronous>, transform_indices = @transform_2, window_bounds = array<i64: 129, 8>}, {transform_indices = @transform_3, window_bounds = array<i64: 56, 8>}]} {
    %c0 = arith.constant 0 : index
    %c0_0 = arith.constant 0 : index
    %0 = vector.load %arg1[%c0, %c0_0] : memref<56x4xf32, #tpu.memory_space<vmem>>, vector<56x4xf32>
    %c4 = arith.constant 4 : index
    %c0_1 = arith.constant 0 : index
    %1 = vector.load %arg2[%c4, %c0_1] : memref<5x128xf32, #tpu.memory_space<vmem>>, vector<1x128xf32>
    %2 = vector.extract_strided_slice %0 {offsets = [0, 0], sizes = [56, 1], strides = [1, 1]} : vector<56x4xf32> to vector<56x1xf32>
    %c0_2 = arith.constant 0 : index
    %c0_3 = arith.constant 0 : index
    %3 = vector.load %arg2[%c0_2, %c0_3] : memref<5x128xf32, #tpu.memory_space<vmem>>, vector<1x128xf32>
    %4 = vector.broadcast %2 : vector<56x1xf32> to vector<56x128xf32>
    %5 = vector.broadcast %3 : vector<1x128xf32> to vector<56x128xf32>
    %6 = arith.mulf %4, %5 : vector<56x128xf32>
    %7 = vector.broadcast %1 : vector<1x128xf32> to vector<56x128xf32>
    %8 = arith.addf %7, %6 : vector<56x128xf32>
    %9 = vector.extract_strided_slice %0 {offsets = [0, 1], sizes = [56, 1], strides = [1, 1]} : vector<56x4xf32> to vector<56x1xf32>
    %c1 = arith.constant 1 : index
    %c0_4 = arith.constant 0 : index
    %10 = vector.load %arg2[%c1, %c0_4] : memref<5x128xf32, #tpu.memory_space<vmem>>, vector<1x128xf32>
    %11 = vector.broadcast %9 : vector<56x1xf32> to vector<56x128xf32>
    %12 = vector.broadcast %10 : vector<1x128xf32> to vector<56x128xf32>
    %13 = arith.mulf %11, %12 : vector<56x128xf32>
    %14 = arith.addf %8, %13 : vector<56x128xf32>
    %15 = vector.extract_strided_slice %0 {offsets = [0, 2], sizes = [56, 1], strides = [1, 1]} : vector<56x4xf32> to vector<56x1xf32>
    %c2 = arith.constant 2 : index
    %c0_5 = arith.constant 0 : index
    %16 = vector.load %arg2[%c2, %c0_5] : memref<5x128xf32, #tpu.memory_space<vmem>>, vector<1x128xf32>
    %17 = vector.broadcast %15 : vector<56x1xf32> to vector<56x128xf32>
    %18 = vector.broadcast %16 : vector<1x128xf32> to vector<56x128xf32>
    %19 = arith.mulf %17, %18 : vector<56x128xf32>
    %20 = arith.addf %14, %19 : vector<56x128xf32>
    %21 = vector.extract_strided_slice %0 {offsets = [0, 3], sizes = [56, 1], strides = [1, 1]} : vector<56x4xf32> to vector<56x1xf32>
    %c3 = arith.constant 3 : index
    %c0_6 = arith.constant 0 : index
    %22 = vector.load %arg2[%c3, %c0_6] : memref<5x128xf32, #tpu.memory_space<vmem>>, vector<1x128xf32>
    %23 = vector.broadcast %21 : vector<56x1xf32> to vector<56x128xf32>
    %24 = vector.broadcast %22 : vector<1x128xf32> to vector<56x128xf32>
    %25 = arith.mulf %23, %24 : vector<56x128xf32>
    %26 = arith.addf %20, %25 : vector<56x128xf32>
    %cst = arith.constant 0.000000e+00 : f32
    %27 = vector.broadcast %cst : f32 to vector<56x128xf32>
    %28 = arith.maximumf %26, %27 : vector<56x128xf32>
    %c0_7 = arith.constant 0 : index
    %c0_8 = arith.constant 0 : index
    %29 = vector.load %arg3[%c0_7, %c0_8] : memref<129x8xf32, #tpu.memory_space<vmem>>, vector<128x8xf32>
    %c128 = arith.constant 128 : index
    %c0_9 = arith.constant 0 : index
    %30 = vector.load %arg3[%c128, %c0_9] : memref<129x8xf32, #tpu.memory_space<vmem>>, vector<1x8xf32>
    %cst_10 = arith.constant dense<0.000000e+00> : vector<56x8xf32>
    %31 = tpu.matmul %28, %29, %cst_10 {dimension_numbers = #tpu.dot_dimension_numbers<[1], [0], [0], [1], [0, 0, 1, 1], [], []>} : vector<56x128xf32>, vector<128x8xf32>, vector<56x8xf32> -> vector<56x8xf32>
    %32 = vector.broadcast %30 : vector<1x8xf32> to vector<56x8xf32>
    %33 = arith.addf %31, %32 : vector<56x8xf32>
    %c0_11 = arith.constant 0 : index
    %c0_12 = arith.constant 0 : index
    %34 = vector.load %arg4[%c0_11, %c0_12] : memref<56x8xf32, #tpu.memory_space<vmem>>, vector<56x8xf32>
    tpu.vector_store %arg4[%c0_11, %c0_12], %33 {strides = array<i32>} : memref<56x8xf32, #tpu.memory_space<vmem>>, vector<56x8xf32>,
    return
  }
  func.func @transform_0(%arg0: i32) -> (i32, i32) {
    %c0_i32 = arith.constant 0 : i32
    %c0_i32_0 = arith.constant 0 : i32
    return %arg0, %c0_i32 : i32, i32
  }
  func.func @transform_1(%arg0: i32) -> (i32, i32) {
    %c0_i32 = arith.constant 0 : i32
    %c0_i32_0 = arith.constant 0 : i32
    %c0_i32_1 = arith.constant 0 : i32
    return %c0_i32, %c0_i32_0 : i32, i32
  }
  func.func @transform_2(%arg0: i32) -> (i32, i32) {
    %c0_i32 = arith.constant 0 : i32
    %c0_i32_0 = arith.constant 0 : i32
    %c0_i32_1 = arith.constant 0 : i32
    return %c0_i32, %c0_i32_0 : i32, i32
  }
  func.func @transform_3(%arg0: i32) -> (i32, i32) {
    %c0_i32 = arith.constant 0 : i32
    %c0_i32_0 = arith.constant 0 : i32
    return %arg0, %c0_i32 : i32, i32
  }
}

</mosaic_0001>

<llo_original>
// kernel: tpu_custom_call.1
$region0: #{tpu_custom_call.1}
  #allocation0 [shape = 'u32[]', space=smem, size = 0x4, offset = 0x4, fixed_abs, tag = 'smem constant byte address 0x4 - core index']
  #allocation1 [shape = 'u32[144,128]{1,0:T(1,128)}', space=vmem, size = 0x12000, scoped, tag = 'internal scratch']
  %s0 = inlined_call_operand.vmem [shape: f32[100,4], index: 0, kind: input, shape index: {}]
  %s1 = inlined_call_operand.vmem [shape: f32[5,128], index: 1, kind: input, shape index: {}]
  %s2 = inlined_call_operand.vmem [shape: f32[129,8], index: 2, kind: input, shape index: {}]
  %s3 = inlined_call_operand.vmem [shape: f32[100,8], index: 3, kind: output, shape index: {}]
  %s4 = sld [smem:[#allocation0]]
  $region93: #{tpu_custom_call.1} parent=0
    _
  %s6 = ssub.s32 1, %s4
  %s7 = scalar_select 0, %s6, %s4
  $region1: #{tpu_custom_call.1} parent=0
    #allocation2 [shape = 'u8[57344]{0}', space=vmem, size = 0xe000, scoped, tag = 'output window, operand 0']
    loop: start=0, step=1, limit=4
    $region2: #{tpu_custom_call.1} parent=1 // loop_pre_header
      _
    $region3: #{tpu_custom_call.1} parent=1 // loop_header
      %s9 = sphi 0, %s13
      %p10 = scmp.ge.s32.totalorder %s9, 4
      %s19 = sphi 0, %s21
      %s22 = sphi 0, %s19
      %s23 = sphi 0, %s22
      %s39 = sphi 0, %s23
      %s43 = sphi 0, %s43
      %s45 = sphi 0, %s43
      %s46 = sphi 0, %s45
      %s60 = sphi 0, %s46
      %s64 = sphi 0, %s64
      %s66 = sphi 0, %s64
      %s67 = sphi 0, %s66
      %s81 = sphi 0, %s67
      %s87 = sphi 0, %s89
      %s90 = sphi 0, %s87
      %s91 = sphi 0, %s90
      %s107 = sphi 0, %s91
    $region4: #{tpu_custom_call.1} parent=1 // loop_header_branch
      %12 = sbr.rel (%p10) target = $region8
    $region5: #{tpu_custom_call.1} parent=1 // loop_body
      %s14 = ssub.s32 %s9, 1
      %s15 = ssub.s32 %s9, 2
      %s16 = sadd.s32 %s9, 1
      %s17 = ssub.s32 %s9, %s16
      %p18 = scmp.eq.s32.totalorder %s17, 0
      %s20 = sadd.s32 %s19, 1
      %s21 = scalar_select %p18, %s19, %s20
      %p24 = pneg %p18
      %p25 = scmp.eq.s32.totalorder %s9, 1
      %p26 = por %p24, %p25
      %p27 = scmp.ne.s32.totalorder %s19, %s22
      %p28 = scmp.eq.s32.totalorder %s9, 0
      %p29 = por %p27, %p28
      %p30 = scmp.ne.s32.totalorder %s19, %s22
      %p31 = scmp.eq.s32.totalorder %s14, 1
      %p32 = por %p30, %p31
      %p33 = scmp.ne.s32.totalorder %s22, %s23
      %p34 = scmp.eq.s32.totalorder %s14, 0
      %p35 = por %p33, %p34
      %p36 = scmp.ne.s32.totalorder %s22, %s23
      %p37 = scmp.eq.s32.totalorder %s15, 1
      %p38 = por %p36, %p37
      %p40 = scmp.ne.s32.totalorder %s23, %s39
      %p41 = scmp.eq.s32.totalorder %s15, 0
      %p42 = por %p40, %p41
      %s44 = sadd.s32 %s43, 1
      %p47 = scmp.eq.s32.totalorder %s9, 1
      %p48 = scmp.ne.s32.totalorder %s43, %s45
      %p49 = scmp.eq.s32.totalorder %s9, 0
      %p50 = por %p48, %p49
      %p51 = scmp.ne.s32.totalorder %s43, %s45
      %p52 = scmp.eq.s32.totalorder %s14, 1
      %p53 = por %p51, %p52
      %p54 = scmp.ne.s32.totalorder %s45, %s46
      %p55 = scmp.eq.s32.totalorder %s14, 0
      %p56 = por %p54, %p55
      %p57 = scmp.ne.s32.totalorder %s45, %s46
      %p58 = scmp.eq.s32.totalorder %s15, 1
      %p59 = por %p57, %p58
      %p61 = scmp.ne.s32.totalorder %s46, %s60
      %p62 = scmp.eq.s32.totalorder %s15, 0
      %p63 = por %p61, %p62
      %s65 = sadd.s32 %s64, 1
      %p68 = scmp.eq.s32.totalorder %s9, 1
      %p69 = scmp.ne.s32.totalorder %s64, %s66
      %p70 = scmp.eq.s32.totalorder %s9, 0
      %p71 = por %p69, %p70
      %p72 = scmp.ne.s32.totalorder %s64, %s66
      %p73 = scmp.eq.s32.totalorder %s14, 1
      %p74 = por %p72, %p73
      %p75 = scmp.ne.s32.totalorder %s66, %s67
      %p76 = scmp.eq.s32.totalorder %s14, 0
      %p77 = por %p75, %p76
      %p78 = scmp.ne.s32.totalorder %s66, %s67
      %p79 = scmp.eq.s32.totalorder %s15, 1
      %p80 = por %p78, %p79
      %p82 = scmp.ne.s32.totalorder %s67, %s81
      %p83 = scmp.eq.s32.totalorder %s15, 0
      %p84 = por %p82, %p83
      %s85 = ssub.s32 %s9, %s16
      %p86 = scmp.eq.s32.totalorder %s85, 0
      %s88 = sadd.s32 %s87, 1
      %s89 = scalar_select %p86, %s87, %s88
      %p92 = pneg %p86
      %p93 = scmp.eq.s32.totalorder %s9, 1
      %p94 = por %p92, %p93
      %p95 = scmp.ne.s32.totalorder %s87, %s90
      %p96 = scmp.eq.s32.totalorder %s9, 0
      %p97 = por %p95, %p96
      %p98 = scmp.ne.s32.totalorder %s87, %s90
      %p99 = scmp.eq.s32.totalorder %s14, 1
      %p100 = por %p98, %p99
      %p101 = scmp.ne.s32.totalorder %s90, %s91
      %p102 = scmp.eq.s32.totalorder %s14, 0
      %p103 = por %p101, %p102
      %p104 = scmp.ne.s32.totalorder %s90, %s91
      %p105 = scmp.eq.s32.totalorder %s15, 1
      %p106 = por %p104, %p105
      %p108 = scmp.ne.s32.totalorder %s91, %s107
      %p109 = scmp.eq.s32.totalorder %s15, 0
      %p110 = por %p108, %p109
      %p111 = scmp.le.s32.totalorder 1, %s9
      %p112 = scmp.lt.s32.totalorder %s9, 3
      %p113 = pnand %p111, %p112
      %p114 = pneg %p113
      // Predicated region
      $region9: #{tpu_custom_call.1} parent=5 // pred_check
        _
      $region10: #{tpu_custom_call.1} parent=5 // pred_check_branch
        %116 = sbr.rel (%p113) target = $region12
      $region11: #{tpu_custom_call.1} parent=5 // pred_region
        %s117 = ssub.s32 %s9, 1
        // Predicated region
        $region13: #{tpu_custom_call.1} parent=11 // pred_check
          %p118 = pneg %p56
        $region14: #{tpu_custom_call.1} parent=11 // pred_check_branch
          %120 = sbr.rel (%p118) target = $region16
        $region15: #{tpu_custom_call.1} parent=11 // pred_region
          _
        $region16: #{tpu_custom_call.1} parent=11 // pred_fallthru
          _
        // Predicated region
        $region17: #{tpu_custom_call.1} parent=11 // pred_check
          %p121 = pneg %p77
        $region18: #{tpu_custom_call.1} parent=11 // pred_check_branch
          %123 = sbr.rel (%p121) target = $region20
        $region19: #{tpu_custom_call.1} parent=11 // pred_region
          _
        $region20: #{tpu_custom_call.1} parent=11 // pred_fallthru
          _
      $region12: #{tpu_custom_call.1} parent=5 // pred_fallthru
        _
      %p124 = scmp.lt.s32.totalorder %s9, 2
      // Predicated region
      $region21: #{tpu_custom_call.1} parent=5 // pred_check
        %p125 = pneg %p124
      $region22: #{tpu_custom_call.1} parent=5 // pred_check_branch
        %127 = sbr.rel (%p125) target = $region24
      $region23: #{tpu_custom_call.1} parent=5 // pred_region
        // Predicated region
        $region25: #{tpu_custom_call.1} parent=23 // pred_check
          %p128 = pneg %p29
        $region26: #{tpu_custom_call.1} parent=23 // pred_check_branch
          %130 = sbr.rel (%p128) target = $region28
        $region27: #{tpu_custom_call.1} parent=23 // pred_region
          %s131 = smul.u32 7, %s9
          %s132 = ssub.s32 13, %s131
          %p133 = scmp.lt.s32.totalorder %s132, 7
          %s134 = scalar_select %p133, %s132, 7
          %s135 = smul.u32 128, %s134
          %p136 = scmp.lt.s32.totalorder %s131, 12
          %s137 = scalar_select %p136, %s131, 12
          %s138 = smul.addr %s137, 8
          %s139 = scalar_lea.vmem %s0, %s138
          %s140 = smul.u32 7, %s9
          %s141 = ssub.s32 13, %s140
          %p142 = scmp.lt.s32.totalorder %s141, 7
          %s143 = scalar_select %p142, %s141, 7
          %s144 = smul.u32 128, %s143
        $region28: #{tpu_custom_call.1} parent=23 // pred_fallthru
          _
      $region24: #{tpu_custom_call.1} parent=5 // pred_fallthru
        _
      %p145 = scmp.le.s32.totalorder 1, %s9
      %p146 = scmp.lt.s32.totalorder %s9, 3
      %p147 = pnand %p145, %p146
      %p148 = pneg %p147
      // Predicated region
      $region29: #{tpu_custom_call.1} parent=5 // pred_check
        _
      $region30: #{tpu_custom_call.1} parent=5 // pred_check_branch
        %150 = sbr.rel (%p147) target = $region32
      $region31: #{tpu_custom_call.1} parent=5 // pred_region
        %s151 = ssub.s32 %s9, 1
        %s152 = smul.u32 7, %s14
        %s153 = ssub.s32 13, %s152
        %p154 = scmp.lt.s32.totalorder %s153, 7
        %s155 = scalar_select %p154, %s153, 7
        %s156 = smul.u32 128, %s155
        %p157 = scmp.lt.s32.totalorder %s152, 12
        %s158 = scalar_select %p157, %s152, 12
        %s159 = smul.addr %s158, 8
        %s160 = scalar_lea.vmem %s0, %s159
        %p161 = pneg %p35
        %p162 = pneg %p32
        %p163 = pneg %p56
        %p164 = pneg %p53
        %p165 = pneg %p77
        %p166 = pneg %p74
        %p167 = pneg %p103
        %p168 = pneg %p100
        %s169 = sand.u32 %s90, 1
        %s170 = sand.u32 %s90, 1
        %s171 = smul.addr %s170, 56
        %s172 = scalar_lea.vmem [#allocation2], %s171
        %s173 = smul.u32 7, %s14
        %s174 = ssub.s32 13, %s173
        %p175 = scmp.lt.s32.totalorder %s174, 7
        %s176 = scalar_select %p175, %s174, 7
        %s177 = smul.u32 128, %s176
        %p178 = scmp.lt.s32.totalorder %s173, 12
        %s179 = scalar_select %p178, %s173, 12
        %s180 = smul.addr %s179, 8
        %s181 = scalar_lea.vmem %s0, %s180
        %s182 = smul.u32 7, %s14
        %s183 = ssub.s32 13, %s182
        %p184 = scmp.lt.s32.totalorder %s183, 7
        %s185 = scalar_select %p184, %s183, 7
        %s186 = smul.u32 128, %s185
        %s187 = smul.u32 7, %s14
        %s188 = ssub.s32 13, %s187
        %p189 = scmp.lt.s32.totalorder %s188, 7
        %s190 = scalar_select %p189, %s188, 7
        %s191 = smul.u32 128, %s190
        %v192 = vld [vmem:[%s181] sm:$0xff]
        %v193 = vld [vmem:[%s181 + $0x8] sm:$0xff]
        %v194 = vld [vmem:[%s181 + $0x10] sm:$0xff]
        %v195 = vld [vmem:[%s181 + $0x18] sm:$0xff]
        %v196 = vld [vmem:[%s181 + $0x20] sm:$0xff]
        %v197 = vld [vmem:[%s181 + $0x28] sm:$0xff]
        %v198 = vld [vmem:[%s181 + $0x30] sm:$0xff]
        %v199 = vld [vmem:[%s1 + $0x4] sm:$0x1]
        %v200 = vld [vmem:[%s1] sm:$0x1]
        %202 = vset.pattern.permute.xlu0 0
        %203 = vperm.xlu0 %202, %v192
        %v204 = vpop.permute.xlu0 %203
        %207 = vset.pattern.permute.xlu0 0
        %208 = vperm.xlu0 %207, %v193
        %v209 = vpop.permute.xlu0 %208
        %212 = vset.pattern.permute.xlu0 0
        %213 = vperm.xlu0 %212, %v194
        %v214 = vpop.permute.xlu0 %213
        %217 = vset.pattern.permute.xlu0 0
        %218 = vperm.xlu0 %217, %v195
        %v219 = vpop.permute.xlu0 %218
        %222 = vset.pattern.permute.xlu0 0
        %223 = vperm.xlu0 %222, %v196
        %v224 = vpop.permute.xlu0 %223
        %227 = vset.pattern.permute.xlu0 0
        %228 = vperm.xlu0 %227, %v197
        %v229 = vpop.permute.xlu0 %228
        %232 = vset.pattern.permute.xlu0 0
        %233 = vperm.xlu0 %232, %v198
        %v234 = vpop.permute.xlu0 %233
        %v236 = vlaneseq
        %v237 = vshrl.u32 %v236, 7
        %v238 = vsub.s32 0, %v237
        %v239 = vrot.slane %v200, %v238
        %v240 = vmul.f32 %v204, %v239
        %v241 = vmul.f32 %v209, %v239
        %v242 = vmul.f32 %v214, %v239
        %v243 = vmul.f32 %v219, %v239
        %v244 = vmul.f32 %v224, %v239
        %v245 = vmul.f32 %v229, %v239
        %v246 = vmul.f32 %v234, %v239
        %v247 = vlaneseq
        %v248 = vshrl.u32 %v247, 7
        %v249 = vsub.s32 0, %v248
        %v250 = vrot.slane %v199, %v249
        %v251 = vadd.f32 %v250, %v240
        %v252 = vadd.f32 %v250, %v241
        %v253 = vadd.f32 %v250, %v242
        %v254 = vadd.f32 %v250, %v243
        %v255 = vadd.f32 %v250, %v244
        %v256 = vadd.f32 %v250, %v245
        %v257 = vadd.f32 %v250, %v246
        %v258 = vld [vmem:[%s1 + $0x1] sm:$0x1]
        %259 = vset.pattern.permute.xlu0 1
        %260 = vperm.xlu0 %259, %v192
        %v261 = vpop.permute.xlu0 %260
        %263 = vset.pattern.permute.xlu0 1
        %264 = vperm.xlu0 %263, %v193
        %v265 = vpop.permute.xlu0 %264
        %267 = vset.pattern.permute.xlu0 1
        %268 = vperm.xlu0 %267, %v194
        %v269 = vpop.permute.xlu0 %268
        %271 = vset.pattern.permute.xlu0 1
        %272 = vperm.xlu0 %271, %v195
        %v273 = vpop.permute.xlu0 %272
        %275 = vset.pattern.permute.xlu0 1
        %276 = vperm.xlu0 %275, %v196
        %v277 = vpop.permute.xlu0 %276
        %279 = vset.pattern.permute.xlu0 1
        %280 = vperm.xlu0 %279, %v197
        %v281 = vpop.permute.xlu0 %280
        %283 = vset.pattern.permute.xlu0 1
        %284 = vperm.xlu0 %283, %v198
        %v285 = vpop.permute.xlu0 %284
        %v287 = vlaneseq
        %v288 = vshrl.u32 %v287, 7
        %v289 = vsub.s32 0, %v288
        %v290 = vrot.slane %v258, %v289
        %v291 = vmul.f32 %v261, %v290
        %v292 = vmul.f32 %v265, %v290
        %v293 = vmul.f32 %v269, %v290
        %v294 = vmul.f32 %v273, %v290
        %v295 = vmul.f32 %v277, %v290
        %v296 = vmul.f32 %v281, %v290
        %v297 = vmul.f32 %v285, %v290
        %v298 = vadd.f32 %v251, %v291
        %v299 = vadd.f32 %v252, %v292
        %v300 = vadd.f32 %v253, %v293
        %v301 = vadd.f32 %v254, %v294
        %v302 = vadd.f32 %v255, %v295
        %v303 = vadd.f32 %v256, %v296
        %v304 = vadd.f32 %v257, %v297
        %v305 = vld [vmem:[%s1 + $0x2] sm:$0x1]
        %306 = vset.pattern.permute.xlu0 2
        %307 = vperm.xlu0 %306, %v192
        %v308 = vpop.permute.xlu0 %307
        %310 = vset.pattern.permute.xlu0 2
        %311 = vperm.xlu0 %310, %v193
        %v312 = vpop.permute.xlu0 %311
        %314 = vset.pattern.permute.xlu0 2
        %315 = vperm.xlu0 %314, %v194
        %v316 = vpop.permute.xlu0 %315
        %318 = vset.pattern.permute.xlu0 2
        %319 = vperm.xlu0 %318, %v195
        %v320 = vpop.permute.xlu0 %319
        %322 = vset.pattern.permute.xlu0 2
        %323 = vperm.xlu0 %322, %v196
        %v324 = vpop.permute.xlu0 %323
        %326 = vset.pattern.permute.xlu0 2
        %327 = vperm.xlu0 %326, %v197
        %v328 = vpop.permute.xlu0 %327
        %330 = vset.pattern.permute.xlu0 2
        %331 = vperm.xlu0 %330, %v198
        %v332 = vpop.permute.xlu0 %331
        %v334 = vlaneseq
        %v335 = vshrl.u32 %v334, 7
        %v336 = vsub.s32 0, %v335
        %v337 = vrot.slane %v305, %v336
        %v338 = vmul.f32 %v308, %v337
        %v339 = vmul.f32 %v312, %v337
        %v340 = vmul.f32 %v316, %v337
        %v341 = vmul.f32 %v320, %v337
        %v342 = vmul.f32 %v324, %v337
        %v343 = vmul.f32 %v328, %v337
        %v344 = vmul.f32 %v332, %v337
        %v345 = vadd.f32 %v298, %v338
        %v346 = vadd.f32 %v299, %v339
        %v347 = vadd.f32 %v300, %v340
        %v348 = vadd.f32 %v301, %v341
        %v349 = vadd.f32 %v302, %v342
        %v350 = vadd.f32 %v303, %v343
        %v351 = vadd.f32 %v304, %v344
        %v352 = vld [vmem:[%s1 + $0x3] sm:$0x1]
        %353 = vset.pattern.permute.xlu0 3
        %354 = vperm.xlu0 %353, %v192
        %v355 = vpop.permute.xlu0 %354
        %357 = vset.pattern.permute.xlu0 3
        %358 = vperm.xlu0 %357, %v193
        %v359 = vpop.permute.xlu0 %358
        %361 = vset.pattern.permute.xlu0 3
        %362 = vperm.xlu0 %361, %v194
        %v363 = vpop.permute.xlu0 %362
        %365 = vset.pattern.permute.xlu0 3
        %366 = vperm.xlu0 %365, %v195
        %v367 = vpop.permute.xlu0 %366
        %369 = vset.pattern.permute.xlu0 3
        %370 = vperm.xlu0 %369, %v196
        %v371 = vpop.permute.xlu0 %370
        %373 = vset.pattern.permute.xlu0 3
        %374 = vperm.xlu0 %373, %v197
        %v375 = vpop.permute.xlu0 %374
        %377 = vset.pattern.permute.xlu0 3
        %378 = vperm.xlu0 %377, %v198
        %v379 = vpop.permute.xlu0 %378
        %v381 = vlaneseq
        %v382 = vshrl.u32 %v381, 7
        %v383 = vsub.s32 0, %v382
        %v384 = vrot.slane %v352, %v383
        %v385 = vmul.f32 %v355, %v384
        %v386 = vmul.f32 %v359, %v384
        %v387 = vmul.f32 %v363, %v384
        %v388 = vmul.f32 %v367, %v384
        %v389 = vmul.f32 %v371, %v384
        %v390 = vmul.f32 %v375, %v384
        %v391 = vmul.f32 %v379, %v384
        %v392 = vadd.f32 %v345, %v385
        %v393 = vadd.f32 %v346, %v386
        %v394 = vadd.f32 %v347, %v387
        %v395 = vadd.f32 %v348, %v388
        %v396 = vadd.f32 %v349, %v389
        %v397 = vadd.f32 %v350, %v390
        %v398 = vadd.f32 %v351, %v391
        %v399 = vmax.f32 %v392, 0.0
        %v400 = vmax.f32 %v393, 0.0
        %v401 = vmax.f32 %v394, 0.0
        %v402 = vmax.f32 %v395, 0.0
        %v403 = vmax.f32 %v396, 0.0
        %v404 = vmax.f32 %v397, 0.0
        %v405 = vmax.f32 %v398, 0.0
        %v406 = vld [vmem:[%s2] sm:$0xff]
        %v407 = vld [vmem:[%s2 + $0x8] sm:$0xff]
        %v408 = vld [vmem:[%s2 + $0x10] sm:$0xff]
        %v409 = vld [vmem:[%s2 + $0x18] sm:$0xff]
        %v410 = vld [vmem:[%s2 + $0x20] sm:$0xff]
        %v411 = vld [vmem:[%s2 + $0x28] sm:$0xff]
        %v412 = vld [vmem:[%s2 + $0x30] sm:$0xff]
        %v413 = vld [vmem:[%s2 + $0x38] sm:$0xff]
        %v414 = vld [vmem:[%s2 + $0x40] sm:$0xff]
        %v415 = vld [vmem:[%s2 + $0x48] sm:$0xff]
        %v416 = vld [vmem:[%s2 + $0x50] sm:$0xff]
        %v417 = vld [vmem:[%s2 + $0x58] sm:$0xff]
        %v418 = vld [vmem:[%s2 + $0x60] sm:$0xff]
        %v419 = vld [vmem:[%s2 + $0x68] sm:$0xff]
        %v420 = vld [vmem:[%s2 + $0x70] sm:$0xff]
        %v421 = vld [vmem:[%s2 + $0x78] sm:$0xff]
        %v422 = vld [vmem:[%s2 + $0x80] sm:$0x1]
        %v423 = vlaneseq
        %v424 = vshrl.u32 %v423, 7
        %v425 = vsub.s32 0, %v424
        %v426 = vrot.slane %v422, %v425
        %427 = vmatprep.subr.mxu0 0.0
        %428 = vmatpush1.msra.mxu0 %v421
        %429 = vmatprep.subr.mxu0 0.0
        %430 = vmatpush1.msra.mxu0 %v420
        %431 = vmatprep.subr.mxu0 0.0
        %432 = vmatpush1.msra.mxu0 %v419
        %433 = vmatprep.subr.mxu0 0.0
        %434 = vmatpush1.msra.mxu0 %v418
        %435 = vmatprep.subr.mxu0 0.0
        %436 = vmatpush1.msra.mxu0 %v417
        %437 = vmatprep.subr.mxu0 0.0
        %438 = vmatpush1.msra.mxu0 %v416
        %439 = vmatprep.subr.mxu0 0.0
        %440 = vmatpush1.msra.mxu0 %v415
        %441 = vmatprep.subr.mxu0 0.0
        %442 = vmatpush1.msra.mxu0 %v414
        %443 = vmatprep.subr.mxu0 0.0
        %444 = vmatpush1.msra.mxu0 %v413
        %445 = vmatprep.subr.mxu0 0.0
        %446 = vmatpush1.msra.mxu0 %v412
        %447 = vmatprep.subr.mxu0 0.0
        %448 = vmatpush1.msra.mxu0 %v411
        %449 = vmatprep.subr.mxu0 0.0
        %450 = vmatpush1.msra.mxu0 %v410
        %451 = vmatprep.subr.mxu0 0.0
        %452 = vmatpush1.msra.mxu0 %v409
        %453 = vmatprep.subr.mxu0 0.0
        %454 = vmatpush1.msra.mxu0 %v408
        %455 = vmatprep.subr.mxu0 0.0
        %456 = vmatpush1.msra.mxu0 %v407
        %457 = vmatprep.subr.mxu0 0.0
        %458 = vmatpush1.msra.mxu0 %v406
        %459 = vmatprep.subr.mxu0 0.0
        %460 = vmatpush2.msra.mxu0 0.0
        %461 = vmatprep.subr.mxu0 0.0
        %462 = vmatpush2.msra.mxu0 0.0
        %463 = vmatprep.subr.mxu0 0.0
        %464 = vmatpush2.msra.mxu0 0.0
        %465 = vmatprep.subr.mxu0 0.0
        %466 = vmatpush2.msra.mxu0 0.0
        %467 = vmatprep.subr.mxu0 0.0
        %468 = vmatpush2.msra.mxu0 0.0
        %469 = vmatprep.subr.mxu0 0.0
        %470 = vmatpush2.msra.mxu0 0.0
        %471 = vmatprep.subr.mxu0 0.0
        %472 = vmatpush2.msra.mxu0 0.0
        %473 = vmatprep.subr.mxu0 0.0
        %474 = vmatpush2.msra.mxu0 0.0
        %475 = vmatprep.subr.mxu0 0.0
        %476 = vmatpush2.msra.mxu0 0.0
        %477 = vmatprep.subr.mxu0 0.0
        %478 = vmatpush2.msra.mxu0 0.0
        %479 = vmatprep.subr.mxu0 0.0
        %480 = vmatpush2.msra.mxu0 0.0
        %481 = vmatprep.subr.mxu0 0.0
        %482 = vmatpush2.msra.mxu0 0.0
        %483 = vmatprep.subr.mxu0 0.0
        %484 = vmatpush2.msra.mxu0 0.0
        %485 = vmatprep.subr.mxu0 0.0
        %486 = vmatpush2.msra.mxu0 0.0
        %487 = vmatprep.subr.mxu0 0.0
        %488 = vmatpush2.msra.mxu0 0.0
        %489 = vmatprep.subr.mxu0 0.0
        %490 = vmatpush2.msra.mxu0 0.0
        %491 = vmatprep.mubr.f32.mxu0 0.0
        %492 = vmatmul.mubr.f32.gmra.mxu0 %v399
        %v493 = vpop.f32.mrf.mxu0
        %v494 = vadd.f32 %v426, %v493
        %v495 = vpop.f32.mrf.mxu0
        %496 = vmatprep.mubr.f32.mxu0 0.0
        %497 = vmatmul.mubr.f32.gmra.mxu0 %v400
        %v498 = vpop.f32.mrf.mxu0
        %v499 = vadd.f32 %v426, %v498
        %v500 = vpop.f32.mrf.mxu0
        %501 = vmatprep.mubr.f32.mxu0 0.0
        %502 = vmatmul.mubr.f32.gmra.mxu0 %v401
        %v503 = vpop.f32.mrf.mxu0
        %v504 = vadd.f32 %v426, %v503
        %v505 = vpop.f32.mrf.mxu0
        %506 = vmatprep.mubr.f32.mxu0 0.0
        %507 = vmatmul.mubr.f32.gmra.mxu0 %v402
        %v508 = vpop.f32.mrf.mxu0
        %v509 = vadd.f32 %v426, %v508
        %v510 = vpop.f32.mrf.mxu0
        %511 = vmatprep.mubr.f32.mxu0 0.0
        %512 = vmatmul.mubr.f32.gmra.mxu0 %v403
        %v513 = vpop.f32.mrf.mxu0
        %v514 = vadd.f32 %v426, %v513
        %v515 = vpop.f32.mrf.mxu0
        %516 = vmatprep.mubr.f32.mxu0 0.0
        %517 = vmatmul.mubr.f32.gmra.mxu0 %v404
        %v518 = vpop.f32.mrf.mxu0
        %v519 = vadd.f32 %v426, %v518
        %v520 = vpop.f32.mrf.mxu0
        %521 = vmatprep.mubr.f32.mxu0 0.0
        %522 = vmatmul.mubr.f32.gmra.mxu0 %v405
        %v523 = vpop.f32.mrf.mxu0
        %v524 = vadd.f32 %v426, %v523
        %v525 = vpop.f32.mrf.mxu0
        %526 = vdwg.mxu0
        %vm527 = vcmask 64512
        %528 = vst.msk [vmem:[%s172] sm:$0xff] %vm527, %v494
        %529 = vst.msk [vmem:[%s172 + $0x8] sm:$0xff] %vm527, %v499
        %530 = vst.msk [vmem:[%s172 + $0x10] sm:$0xff] %vm527, %v504
        %531 = vst.msk [vmem:[%s172 + $0x18] sm:$0xff] %vm527, %v509
        %532 = vst.msk [vmem:[%s172 + $0x20] sm:$0xff] %vm527, %v514
        %533 = vst.msk [vmem:[%s172 + $0x28] sm:$0xff] %vm527, %v519
        %534 = vst.msk [vmem:[%s172 + $0x30] sm:$0xff] %vm527, %v524
        %s535 = sand.u32 %s90, 1
        %s536 = sand.u32 %s90, 1
        %s537 = smul.addr %s536, 56
        %s538 = scalar_lea.vmem [#allocation2], %s537
        // Predicated region
        $region33: #{tpu_custom_call.1} parent=31 // pred_check
          %p539 = pneg %p100
        $region34: #{tpu_custom_call.1} parent=31 // pred_check_branch
          %541 = sbr.rel (%p539) target = $region36
        $region35: #{tpu_custom_call.1} parent=31 // pred_region
          %s542 = smul.u32 7, %s14
          %s543 = ssub.s32 13, %s542
          %p544 = scmp.lt.s32.totalorder %s543, 7
          %s545 = scalar_select %p544, %s543, 7
          %s546 = smul.u32 128, %s545
          %p547 = scmp.ne.s32.totalorder 0, %s546
          %s548 = smul.addr %s542, 8
          %s549 = scalar_lea.vmem %s3, %s548
          // Predicated region
          $region37: #{tpu_custom_call.1} parent=35 // pred_check
            %p550 = pneg %p547
          $region38: #{tpu_custom_call.1} parent=35 // pred_check_branch
            %552 = sbr.rel (%p550) target = $region40
          $region39: #{tpu_custom_call.1} parent=35 // pred_region
            // Predicated region
            $region41: #{tpu_custom_call.1} parent=39 // pred_check
              _
            $region42: #{tpu_custom_call.1} parent=39 // pred_check_branch
              %554 = sbr.rel (0) target = $region44
            $region43: #{tpu_custom_call.1} parent=39 // pred_region
              // Predicated region
              $region63: #{tpu_custom_call.1} parent=43 // pred_check
                _
              $region64: #{tpu_custom_call.1} parent=43 // pred_check_branch
                %617 = sbr.rel (0) target = $region66
              $region65: #{tpu_custom_call.1} parent=43 // pred_region
                %s618 = sdiv.u32.pop %s545, 7
                %s619 = srem.u32.pop %s545, 7
                // While loop
                $region67: #{tpu_custom_call.1} parent=65 // loop_pre_header
                  _
                $region68: #{tpu_custom_call.1} parent=65 // loop_header
                  %s621 = sphi 0, %s623
                  %p622 = scmp.ge.s32.totalorder %s621, %s618
                  %s626 = sphi 0, %s645
                  %s627 = sphi %s538, %s648
                  %s628 = sphi %s549, %s649
                $region69: #{tpu_custom_call.1} parent=65 // loop_header_branch
                  %625 = sbr.rel (%p622) target = $region73
                $region70: #{tpu_custom_call.1} parent=65 // loop_body
                  %v629 = vld [vmem:[%s627] sm:$0xff]
                  %630 = vst [vmem:[%s628] sm:$0xff] %v629
                  %v631 = vld [vmem:[%s627 + $0x8] sm:$0xff]
                  %632 = vst [vmem:[%s628 + $0x8] sm:$0xff] %v631
                  %v633 = vld [vmem:[%s627 + $0x10] sm:$0xff]
                  %634 = vst [vmem:[%s628 + $0x10] sm:$0xff] %v633
                  %v635 = vld [vmem:[%s627 + $0x18] sm:$0xff]
                  %636 = vst [vmem:[%s628 + $0x18] sm:$0xff] %v635
                  %v637 = vld [vmem:[%s627 + $0x20] sm:$0xff]
                  %638 = vst [vmem:[%s628 + $0x20] sm:$0xff] %v637
                  %v639 = vld [vmem:[%s627 + $0x28] sm:$0xff]
                  %640 = vst [vmem:[%s628 + $0x28] sm:$0xff] %v639
                  %v641 = vld [vmem:[%s627 + $0x30] sm:$0xff]
                  %642 = vst [vmem:[%s628 + $0x30] sm:$0xff] %v641
                  %s643 = sadd.s32 1, %s626
                  %p644 = scmp.ge.s32.totalorder %s643, %s618
                  %s645 = scalar_select %p644, 0, %s643
                  %s646 = smul.u32 %s645, 56
                  %s647 = smul.u32 %s645, 56
                  %s648 = scalar_lea.vmem %s538, %s646 [#allocation2]
                  %s649 = scalar_lea.vmem %s549, %s647
                $region71: #{tpu_custom_call.1} parent=65 // loop_footer
                  %s623 = sadd.s32 %s621, 1
                $region72: #{tpu_custom_call.1} parent=65 // loop_footer_branch
                  %620 = sbr.rel target = $region68
                $region73: #{tpu_custom_call.1} parent=65 // loop_exit
                  _
                %s650 = sdiv.u32.pop %s545, 7
                %s651 = srem.u32.pop %s545, 7
                %s652 = smul.u32 %s650, 7
                %s653 = smul.u32 8, %s652
                %s654 = scalar_lea.vmem %s538, %s653 [#allocation2]
                %s655 = smul.u32 8, %s652
                %s656 = scalar_lea.vmem %s549, %s655
                // While loop
                $region74: #{tpu_custom_call.1} parent=65 // loop_pre_header
                  _
                $region75: #{tpu_custom_call.1} parent=65 // loop_header
                  %s658 = sphi 0, %s660
                  %p659 = scmp.ge.s32.totalorder %s658, %s651
                  %s663 = sphi 0, %s670
                  %s664 = sphi %s654, %s673
                  %s665 = sphi %s656, %s674
                $region76: #{tpu_custom_call.1} parent=65 // loop_header_branch
                  %662 = sbr.rel (%p659) target = $region80
                $region77: #{tpu_custom_call.1} parent=65 // loop_body
                  %v666 = vld [vmem:[%s664] sm:$0xff]
                  %667 = vst [vmem:[%s665] sm:$0xff] %v666
                  %s668 = sadd.s32 1, %s663
                  %p669 = scmp.ge.s32.totalorder %s668, %s651
                  %s670 = scalar_select %p669, 0, %s668
                  %s671 = smul.u32 %s670, 8
                  %s672 = smul.u32 %s670, 8
                  %s673 = scalar_lea.vmem %s654, %s671 [#allocation2]
                  %s674 = scalar_lea.vmem %s656, %s672
                $region78: #{tpu_custom_call.1} parent=65 // loop_footer
                  %s660 = sadd.s32 %s658, 1
                $region79: #{tpu_custom_call.1} parent=65 // loop_footer_branch
                  %657 = sbr.rel target = $region75
                $region80: #{tpu_custom_call.1} parent=65 // loop_exit
                  _
              $region66: #{tpu_custom_call.1} parent=43 // pred_fallthru
                _
              // Predicated region
              $region81: #{tpu_custom_call.1} parent=43 // pred_check
                _
              $region82: #{tpu_custom_call.1} parent=43 // pred_check_branch
                %676 = sbr.rel target = $region84
              $region83: #{tpu_custom_call.1} parent=43 // pred_region
                _
              $region84: #{tpu_custom_call.1} parent=43 // pred_fallthru
                _
            $region44: #{tpu_custom_call.1} parent=39 // pred_fallthru
              _
            // Predicated region
            $region45: #{tpu_custom_call.1} parent=39 // pred_check
              _
            $region46: #{tpu_custom_call.1} parent=39 // pred_check_branch
              %556 = sbr.rel target = $region48
            $region47: #{tpu_custom_call.1} parent=39 // pred_region
              %s558 = ssub.s32 256, 1
              %s559 = sdiv.u32.pop %s545, 7
              %s560 = srem.u32.pop %s545, 7
              // While loop
              $region49: #{tpu_custom_call.1} parent=47 // loop_pre_header
                _
              $region50: #{tpu_custom_call.1} parent=47 // loop_header
                %s562 = sphi 0, %s564
                %p563 = scmp.ge.s32.totalorder %s562, %s559
                %s567 = sphi 0, %s586
                %s568 = sphi %s538, %s589
                %s569 = sphi %s549, %s590
              $region51: #{tpu_custom_call.1} parent=47 // loop_header_branch
                %566 = sbr.rel (%p563) target = $region55
              $region52: #{tpu_custom_call.1} parent=47 // loop_body
                %v570 = vld [vmem:[%s568] sm:%s558]
                %571 = vst [vmem:[%s569] sm:%s558] %v570
                %v572 = vld [vmem:[%s568 + $0x8] sm:%s558]
                %573 = vst [vmem:[%s569 + $0x8] sm:%s558] %v572
                %v574 = vld [vmem:[%s568 + $0x10] sm:%s558]
                %575 = vst [vmem:[%s569 + $0x10] sm:%s558] %v574
                %v576 = vld [vmem:[%s568 + $0x18] sm:%s558]
                %577 = vst [vmem:[%s569 + $0x18] sm:%s558] %v576
                %v578 = vld [vmem:[%s568 + $0x20] sm:%s558]
                %579 = vst [vmem:[%s569 + $0x20] sm:%s558] %v578
                %v580 = vld [vmem:[%s568 + $0x28] sm:%s558]
                %581 = vst [vmem:[%s569 + $0x28] sm:%s558] %v580
                %v582 = vld [vmem:[%s568 + $0x30] sm:%s558]
                %583 = vst [vmem:[%s569 + $0x30] sm:%s558] %v582
                %s584 = sadd.s32 1, %s567
                %p585 = scmp.ge.s32.totalorder %s584, %s559
                %s586 = scalar_select %p585, 0, %s584
                %s587 = smul.u32 %s586, 56
                %s588 = smul.u32 %s586, 56
                %s589 = scalar_lea.vmem %s538, %s587 [#allocation2]
                %s590 = scalar_lea.vmem %s549, %s588
              $region53: #{tpu_custom_call.1} parent=47 // loop_footer
                %s564 = sadd.s32 %s562, 1
              $region54: #{tpu_custom_call.1} parent=47 // loop_footer_branch
                %561 = sbr.rel target = $region50
              $region55: #{tpu_custom_call.1} parent=47 // loop_exit
                _
              %s591 = sdiv.u32.pop %s545, 7
              %s592 = srem.u32.pop %s545, 7
              %s593 = smul.u32 %s591, 7
              %s594 = smul.u32 8, %s593
              %s595 = scalar_lea.vmem %s538, %s594 [#allocation2]
              %s596 = smul.u32 8, %s593
              %s597 = scalar_lea.vmem %s549, %s596
              // While loop
              $region56: #{tpu_custom_call.1} parent=47 // loop_pre_header
                _
              $region57: #{tpu_custom_call.1} parent=47 // loop_header
                %s599 = sphi 0, %s601
                %p600 = scmp.ge.s32.totalorder %s599, %s592
                %s604 = sphi 0, %s611
                %s605 = sphi %s595, %s614
                %s606 = sphi %s597, %s615
              $region58: #{tpu_custom_call.1} parent=47 // loop_header_branch
                %603 = sbr.rel (%p600) target = $region62
              $region59: #{tpu_custom_call.1} parent=47 // loop_body
                %v607 = vld [vmem:[%s605] sm:%s558]
                %608 = vst [vmem:[%s606] sm:%s558] %v607
                %s609 = sadd.s32 1, %s604
                %p610 = scmp.ge.s32.totalorder %s609, %s592
                %s611 = scalar_select %p610, 0, %s609
                %s612 = smul.u32 %s611, 8
                %s613 = smul.u32 %s611, 8
                %s614 = scalar_lea.vmem %s595, %s612 [#allocation2]
                %s615 = scalar_lea.vmem %s597, %s613
              $region60: #{tpu_custom_call.1} parent=47 // loop_footer
                %s601 = sadd.s32 %s599, 1
              $region61: #{tpu_custom_call.1} parent=47 // loop_footer_branch
                %598 = sbr.rel target = $region57
              $region62: #{tpu_custom_call.1} parent=47 // loop_exit
                _
            $region48: #{tpu_custom_call.1} parent=39 // pred_fallthru
              _
          $region40: #{tpu_custom_call.1} parent=35 // pred_fallthru
            _
          %677 = vnop
        $region36: #{tpu_custom_call.1} parent=31 // pred_fallthru
          _
      $region32: #{tpu_custom_call.1} parent=5 // pred_fallthru
        _
      %p678 = scmp.le.s32.totalorder 2, %s9
      // Predicated region
      $region85: #{tpu_custom_call.1} parent=5 // pred_check
        %p679 = pneg %p678
      $region86: #{tpu_custom_call.1} parent=5 // pred_check_branch
        %681 = sbr.rel (%p679) target = $region88
      $region87: #{tpu_custom_call.1} parent=5 // pred_region
        %s682 = ssub.s32 %s9, 2
        // Predicated region
        $region89: #{tpu_custom_call.1} parent=87 // pred_check
          %p683 = pneg %p106
        $region90: #{tpu_custom_call.1} parent=87 // pred_check_branch
          %685 = sbr.rel (%p683) target = $region92
        $region91: #{tpu_custom_call.1} parent=87 // pred_region
          %s686 = sand.u32 %s91, 1
          %s687 = sand.u32 %s91, 1
          %s688 = smul.addr %s687, 56
          %s689 = scalar_lea.vmem [#allocation2], %s688
        $region92: #{tpu_custom_call.1} parent=87 // pred_fallthru
          _
      $region88: #{tpu_custom_call.1} parent=5 // pred_fallthru
        _
    $region6: #{tpu_custom_call.1} parent=1 // loop_footer
      %s13 = sadd.s32 1, %s9
    $region7: #{tpu_custom_call.1} parent=1 // loop_footer_branch
      %8 = sbr.rel target = $region3
    $region8: #{tpu_custom_call.1} parent=1 // loop_exit
      _

</llo_original>
